<compile_context>
chip_gen: v6e
topology: v6e:2x2x1
jax: 0.10.0
libtpu: 0.0.40
codegen_flags: <defaults>
</compile_context>

<pallas_src>
import functools

import numpy as np
import jax
from jax import lax
import jax.numpy as jnp
from jax.experimental import pallas as pl
from jax.experimental.pallas import tpu as pltpu


def _round_up(v, m):
    return ((v + m - 1) // m) * m


def _pick_col_tile(total, target):
    """Largest column tile <= target that is a multiple of 128 and divides
    `total`; falls back to the full width (always a legal block dim)."""
    if total <= target:
        return total
    t = (target // 128) * 128
    while t >= 128:
        if total % t == 0:
            return t
        t -= 128
    return total


def _vmem_budget_bytes():
    """~3/4 of physical VMEM (v7x: 64 MiB -> 48 MiB, v5e/v6e: 128 -> 96 MiB)."""
    try:
        cap = getattr(pltpu.get_tpu_info(), "vmem_capacity_bytes", None)
        if cap:
            return int(min(cap * 3 // 4, 96 * 2 ** 20))
    except Exception:
        pass
    return 48 * 2 ** 20


def _build_w(pooling_counts, N):
    """Builds W (N, N*N): out.reshape(-1, N*N) = x.reshape(-1, N) @ W.

    Replicates the PyTorch module's bookkeeping exactly: the main diagonal
    holds x, and each maskij level holds the corresponding AvgPool1d(2,1) /
    AvgPool1d(3,2) cascade output, expressed as a fixed linear map of x."""
    maskij = []
    stride, offset = 1, 0
    for c in pooling_counts:
        for _ in range(c):
            offset += stride
            i = np.arange(0, N - offset, stride)
            j = np.arange(offset, N, stride)
            maskij.append((i, j))
        stride *= 2

    pooler_specs = [(2, 1)] * pooling_counts[0]
    for c in pooling_counts[1:]:
        pooler_specs += [(3, 2)] + [(2, 1)] * (c - 1)

    W = np.zeros((N, N, N), np.float64)
    W[np.arange(N), np.arange(N), np.arange(N)] = 1.0          # diagonal copy

    C = np.eye(N, dtype=np.float64)     # row r = weights of cascade[r] w.r.t. x
    for (k, _), (i, j) in zip(pooler_specs, maskij):
        L = C.shape[0]
        if L < k:            # degenerate level guard (PyTorch itself would error here)
            break
        if k == 2:                                   # AvgPool1d(2, 1)
            C = (C[:-1] + C[1:]) / 2.0
        else:                                        # AvgPool1d(3, 2)
            Lo = (L - 3) // 2 + 1
            C = (C[0:2 * Lo:2] + C[1:2 * Lo:2] + C[2:2 * Lo + 1:2]) / 3.0
        assert C.shape[0] == len(i), "maskij / pooled-length mismatch"
        if len(i):
            W[:, i, j] = C.T
    return W.reshape(N, N * N)


@functools.lru_cache(maxsize=None)
def _get_w_device(pooling_counts, N, dtype_name):
    """Host build + H2D upload of W happens once per (pooling_counts, N, dtype)."""
    w = _build_w(pooling_counts, N)
    return jnp.asarray(w, dtype=dtype_name)


def _make_kernel(exact):
    if exact:
        def kernel(x_ref, w_ref, o_ref):
            # f32 x f32 @ HIGHEST: keeps the diagonal copy and pooled values at
            # f32 fidelity (matches the PyTorch cascade to ~1e-6).  K = N is
            # small, so this stays HBM-write-bound on v6e/v7x.
            o_ref[...] = jnp.dot(
                x_ref[...].astype(jnp.float32), w_ref[...],
                preferred_element_type=jnp.float32,
                precision=lax.Precision.HIGHEST,
            ).astype(o_ref.dtype)
    else:
        def kernel(x_ref, w_ref, o_ref):
            # Single bf16 MXU pass (W shipped as bf16): fastest, bf16 accuracy.
            o_ref[...] = jnp.dot(
                x_ref[...].astype(jnp.bfloat16), w_ref[...],
                preferred_element_type=jnp.float32,
            ).astype(o_ref.dtype)
    return kernel


def sparse_mean_pool(x, pooling_counts, *, tile_m=512, exact=True):
    """map2d = SparseMeanPool(pooling_counts, N)(x) for x of shape (B, D, N)."""
    pooling_counts = tuple(int(c) for c in pooling_counts)
    B, D, N = x.shape
    NN = N * N
    w_dtype = jnp.float32 if exact else jnp.bfloat16
    W = _get_w_device(pooling_counts, N, np.dtype(w_dtype).name)

    x_b = np.dtype(x.dtype).itemsize
    w_b = np.dtype(w_dtype).itemsize
    o_b = x_b
    mult = max(8, 32 // x_b)          # sublane multiple: 8 (f32) / 16 (bf16) / 32 (int8)
    slack = 1 << 20
    budget = _vmem_budget_bytes()

    # --- row tiling: collapse (B, D) -> M rows; keep >=2 row tiles (v7x megacore) ---
    M = B * D
    xm = x.reshape(M, N)
    max_rows = max(mult, _round_up(min(tile_m, M), mult))
    n_m = -(-M // max_rows)
    if n_m < 2 and M >= 2 * mult:
        n_m = 2
    tm = _round_up(-(-M // n_m), mult)

    # --- column tiling sized from the real double-buffered VMEM footprint ---
    def footprint(tm_, tc_):
        return 2 * (tm_ * N * x_b + N * tc_ * w_b + tm_ * tc_ * o_b) + slack

    tc_budget = (budget - slack - 2 * tm * N * x_b) // (2 * (N * w_b + tm * o_b))
    tc = _pick_col_tile(NN, max(128, int(tc_budget)))
    while footprint(tm, tc) > budget and tm > mult:   # fallback tc == NN blew budget
        n_m *= 2
        tm = _round_up(-(-M // n_m), mult)
    Mp = tm * n_m
    if Mp != M:
        xm = jnp.pad(xm, ((0, Mp - M), (0, 0)))
    n_c = NN // tc

    # Column axis OUTER: the W column block's index is constant across the
    # inner row loop, so it is DMA'd once per column tile (x blocks are tiny).
    grid = (n_c, n_m)
    out_flat = pl.pallas_call(
        _make_kernel(exact),
        out_shape=jax.ShapeDtypeStruct((Mp, NN), x.dtype),
        grid=grid,
        in_specs=[
            pl.BlockSpec((tm, N), lambda c, m: (m, 0)),
            pl.BlockSpec((N, tc), lambda c, m: (0, c)),
        ],
        out_specs=pl.BlockSpec((tm, tc), lambda c, m: (m, c)),
        compiler_params=pltpu.CompilerParams(
            dimension_semantics=("parallel", "parallel"),
            vmem_limit_bytes=int(max(footprint(tm, tc) + (2 << 20), 16 * 2 ** 20)),
        ),
    )(xm, W)
    return out_flat[:M].reshape(B, D, N, N)


def _reference(x, pooling_counts):
    """Pure numpy replica of the PyTorch forward (sanity check)."""
    x = np.asarray(x)
    B, D, N = x.shape
    maskij = []
    stride, offset = 1, 0
    for c in pooling_counts:
        for _ in range(c):
            offset += stride
            maskij.append((list(range(0, N - offset, stride)),
                           list(range(offset, N, stride))))
        stride *= 2
    pooler_specs = [(2, 1)] * pooling_counts[0]
    for c in pooling_counts[1:]:
        pooler_specs += [(3, 2)] + [(2, 1)] * (c - 1)

    map2d = np.zeros((B, D, N, N), x.dtype)
    map2d[:, :, range(N), range(N)] = x
    cur = x
    for (k, _), (i, j) in zip(pooler_specs, maskij):
        if k == 2:
            cur = (cur[..., :-1] + cur[..., 1:]) / np.float32(2.0)
        else:
            Lo = (cur.shape[-1] - 3) // 2 + 1
            sm = cur[..., :-2] + cur[..., 1:-1] + cur[..., 2:]
            cur = sm[..., 0:2 * Lo:2] / np.float32(3.0)
        map2d[:, :, i, j] = cur
    return map2d


if __name__ == "__main__":
    B, D, N = 2, 32, 16
    pooling_counts = (3, 2)   # poolers: 3x AvgPool1d(2,1), AvgPool1d(3,2), AvgPool1d(2,1)

    key = jax.random.PRNGKey(0)
    x = jax.random.normal(key, (B, D, N), dtype=jnp.float32)

    out = jax.block_until_ready(sparse_mean_pool(x, pooling_counts))

    ref = _reference(np.asarray(x), pooling_counts)
    np.testing.assert_allclose(np.asarray(out), ref, rtol=1e-5, atol=1e-5)
    print("KERNEL_OK")
</pallas_src>

<mosaic_0001>
module attributes {stable_mosaic.version = 11 : i64} {
  func.func @kernel(%arg0: i32, %arg1: i32, %arg2: memref<32x16xf32, #tpu.memory_space<vmem>>, %arg3: memref<16x256xf32, #tpu.memory_space<vmem>>, %arg4: memref<32x256xf32, #tpu.memory_space<vmem>>) attributes {dimension_semantics = [#tpu.dimension_semantics<parallel>, #tpu.dimension_semantics<parallel>], iteration_bounds = array<i64: 1, 2>, scalar_prefetch = 0 : i64, scratch_operands = 0 : i64, tpu.core_type = #tpu.core_type<tc>, window_params = [{transform_indices = @transform_0, window_bounds = array<i64: 32, 16>}, {transform_indices = @transform_1, window_bounds = array<i64: 16, 256>}, {transform_indices = @transform_2, window_bounds = array<i64: 32, 256>}]} {
    %c0 = arith.constant 0 : index
    %c0_0 = arith.constant 0 : index
    %0 = vector.load %arg2[%c0, %c0_0] : memref<32x16xf32, #tpu.memory_space<vmem>>, vector<32x16xf32>
    %c0_1 = arith.constant 0 : index
    %c0_2 = arith.constant 0 : index
    %1 = vector.load %arg3[%c0_1, %c0_2] : memref<16x256xf32, #tpu.memory_space<vmem>>, vector<16x256xf32>
    %cst = arith.constant dense<0.000000e+00> : vector<32x256xf32>
    %2 = tpu.matmul %0, %1, %cst {dimension_numbers = #tpu.dot_dimension_numbers<[1], [0], [0], [1], [0, 0, 1, 1], [], []>, precision = #tpu.contract_precision<fp32>} : vector<32x16xf32>, vector<16x256xf32>, vector<32x256xf32> -> vector<32x256xf32>
    %c0_3 = arith.constant 0 : index
    %c0_4 = arith.constant 0 : index
    %3 = vector.load %arg4[%c0_3, %c0_4] : memref<32x256xf32, #tpu.memory_space<vmem>>, vector<32x256xf32>
    tpu.vector_store %arg4[%c0_3, %c0_4], %2 {strides = array<i32>} : memref<32x256xf32, #tpu.memory_space<vmem>>, vector<32x256xf32>,
    return
  }
  func.func @transform_0(%arg0: i32, %arg1: i32) -> (i32, i32) {
    %c0_i32 = arith.constant 0 : i32
    %c0_i32_0 = arith.constant 0 : i32
    return %arg1, %c0_i32 : i32, i32
  }
  func.func @transform_1(%arg0: i32, %arg1: i32) -> (i32, i32) {
    %c0_i32 = arith.constant 0 : i32
    %c0_i32_0 = arith.constant 0 : i32
    return %c0_i32, %arg0 : i32, i32
  }
  func.func @transform_2(%arg0: i32, %arg1: i32) -> (i32, i32) {
    %c0_i32 = arith.constant 0 : i32
    return %arg1, %arg0 : i32, i32
  }
}

</mosaic_0001>

<llo_original>
// kernel: tpu_custom_call.1
$region0: #{tpu_custom_call.1}
  #allocation0 [shape = 'u32[]', space=smem, size = 0x4, offset = 0x4, fixed_abs, tag = 'smem constant byte address 0x4 - core index']
  #allocation1 [shape = 'u32[144,128]{1,0:T(1,128)}', space=vmem, size = 0x12000, scoped, tag = 'internal scratch']
  %s0 = inlined_call_operand.vmem [shape: f32[64,16], index: 0, kind: input, shape index: {}]
  %s1 = inlined_call_operand.vmem [shape: f32[16,256], index: 1, kind: input, shape index: {}]
  %s2 = inlined_call_operand.hbm [shape: f32[64,256], index: 2, kind: output, shape index: {}]
  %s3 = sld [smem:[#allocation0]]
  $region41: #{tpu_custom_call.1} parent=0
    _
  %s5 = ssub.s32 1, %s3
  %s6 = scalar_select 0, %s5, %s3
  $region1: #{tpu_custom_call.1} parent=0
    #allocation2 [shape = 'u8[65536]{0}', space=vmem, size = 0x10000, scoped, tag = 'output window, operand 0']
    #allocation3 [shape = 's32[2]{0}', space=sflag, size = 0x8, scoped, tag = 'scoped memory for tpu_custom_call.1']
    %7 = vsyncpa [#allocation3], 0
    %s8 = scalar_lea.sflag [#allocation3], 1
    %9 = vsyncpa %s8, 0
    loop: start=0, step=1, limit=4
    $region2: #{tpu_custom_call.1} parent=1 // loop_pre_header
      _
    $region3: #{tpu_custom_call.1} parent=1 // loop_header
      %s11 = sphi 0, %s15
      %p12 = scmp.ge.s32.totalorder %s11, 4
      %s18 = sphi 0, %s30
      %s19 = sphi 0, %s26
      %s20 = sphi 0, %s18
      %s21 = sphi 0, %s19
      %s22 = sphi 0, %s20
      %s23 = sphi 0, %s21
      %s33 = sphi 0, %s35
      %s36 = sphi 0, %s33
      %s37 = sphi 0, %s36
      %s53 = sphi 0, %s37
      %s59 = sphi 0, %s61
      %s62 = sphi 0, %s59
      %s63 = sphi 0, %s62
      %s79 = sphi 0, %s63
      %s87 = sphi 0, %s89
      %s90 = sphi 0, %s87
      %s91 = sphi 0, %s90
      %s107 = sphi 0, %s91
    $region4: #{tpu_custom_call.1} parent=1 // loop_header_branch
      %14 = sbr.rel (%p12) target = $region8
    $region5: #{tpu_custom_call.1} parent=1 // loop_body
      %s16 = ssub.s32 %s11, 1
      %s17 = ssub.s32 %s11, 2
      %s24 = sadd.s32 1, %s19
      %p25 = scmp.ge.s32.totalorder %s24, 2
      %s26 = scalar_select %p25, 0, %s24
      %s27 = sadd.s32 1, %s18
      %s28 = scalar_select %p25, %s27, %s18
      %p29 = scmp.ge.s32.totalorder %s28, 1
      %s30 = scalar_select %p29, 0, %s28
      %s31 = ssub.s32 %s19, %s26
      %p32 = scmp.eq.s32.totalorder %s31, 0
      %s34 = sadd.s32 %s33, 1
      %s35 = scalar_select %p32, %s33, %s34
      %p38 = pneg %p32
      %p39 = scmp.eq.s32.totalorder %s11, 1
      %p40 = por %p38, %p39
      %p41 = scmp.ne.s32.totalorder %s33, %s36
      %p42 = scmp.eq.s32.totalorder %s11, 0
      %p43 = por %p41, %p42
      %p44 = scmp.ne.s32.totalorder %s33, %s36
      %p45 = scmp.eq.s32.totalorder %s16, 1
      %p46 = por %p44, %p45
      %p47 = scmp.ne.s32.totalorder %s36, %s37
      %p48 = scmp.eq.s32.totalorder %s16, 0
      %p49 = por %p47, %p48
      %p50 = scmp.ne.s32.totalorder %s36, %s37
      %p51 = scmp.eq.s32.totalorder %s17, 1
      %p52 = por %p50, %p51
      %p54 = scmp.ne.s32.totalorder %s37, %s53
      %p55 = scmp.eq.s32.totalorder %s17, 0
      %p56 = por %p54, %p55
      %s57 = ssub.s32 %s18, %s30
      %p58 = scmp.eq.s32.totalorder %s57, 0
      %s60 = sadd.s32 %s59, 1
      %s61 = scalar_select %p58, %s59, %s60
      %p64 = pneg %p58
      %p65 = scmp.eq.s32.totalorder %s11, 1
      %p66 = por %p64, %p65
      %p67 = scmp.ne.s32.totalorder %s59, %s62
      %p68 = scmp.eq.s32.totalorder %s11, 0
      %p69 = por %p67, %p68
      %p70 = scmp.ne.s32.totalorder %s59, %s62
      %p71 = scmp.eq.s32.totalorder %s16, 1
      %p72 = por %p70, %p71
      %p73 = scmp.ne.s32.totalorder %s62, %s63
      %p74 = scmp.eq.s32.totalorder %s16, 0
      %p75 = por %p73, %p74
      %p76 = scmp.ne.s32.totalorder %s62, %s63
      %p77 = scmp.eq.s32.totalorder %s17, 1
      %p78 = por %p76, %p77
      %p80 = scmp.ne.s32.totalorder %s63, %s79
      %p81 = scmp.eq.s32.totalorder %s17, 0
      %p82 = por %p80, %p81
      %s83 = ssub.s32 %s19, %s26
      %s84 = ssub.s32 %s18, %s30
      %s85 = sor.u32 %s83, %s84
      %p86 = scmp.eq.s32.totalorder %s85, 0
      %s88 = sadd.s32 %s87, 1
      %s89 = scalar_select %p86, %s87, %s88
      %p92 = pneg %p86
      %p93 = scmp.eq.s32.totalorder %s11, 1
      %p94 = por %p92, %p93
      %p95 = scmp.ne.s32.totalorder %s87, %s90
      %p96 = scmp.eq.s32.totalorder %s11, 0
      %p97 = por %p95, %p96
      %p98 = scmp.ne.s32.totalorder %s87, %s90
      %p99 = scmp.eq.s32.totalorder %s16, 1
      %p100 = por %p98, %p99
      %p101 = scmp.ne.s32.totalorder %s90, %s91
      %p102 = scmp.eq.s32.totalorder %s16, 0
      %p103 = por %p101, %p102
      %p104 = scmp.ne.s32.totalorder %s90, %s91
      %p105 = scmp.eq.s32.totalorder %s17, 1
      %p106 = por %p104, %p105
      %p108 = scmp.ne.s32.totalorder %s91, %s107
      %p109 = scmp.eq.s32.totalorder %s17, 0
      %p110 = por %p108, %p109
      %p111 = scmp.le.s32.totalorder 1, %s11
      %p112 = scmp.lt.s32.totalorder %s11, 3
      %p113 = pnand %p111, %p112
      %p114 = pneg %p113
      // Predicated region
      $region9: #{tpu_custom_call.1} parent=5 // pred_check
        _
      $region10: #{tpu_custom_call.1} parent=5 // pred_check_branch
        %116 = sbr.rel (%p113) target = $region12
      $region11: #{tpu_custom_call.1} parent=5 // pred_region
        %s117 = ssub.s32 %s11, 1
        // Predicated region
        $region13: #{tpu_custom_call.1} parent=11 // pred_check
          %p118 = pneg %p75
        $region14: #{tpu_custom_call.1} parent=11 // pred_check_branch
          %120 = sbr.rel (%p118) target = $region16
        $region15: #{tpu_custom_call.1} parent=11 // pred_region
          %s121 = smul.u32 2, %s20
          %p122 = scmp.lt.s32.totalorder %s121, 1
          %s123 = scalar_select %p122, %s121, 1
          %s124 = smul.addr %s123, 8
          %s125 = scalar_lea.vmem %s1, %s124
          %s126 = smul.u32 2, %s20
        $region16: #{tpu_custom_call.1} parent=11 // pred_fallthru
          _
      $region12: #{tpu_custom_call.1} parent=5 // pred_fallthru
        _
      %p127 = scmp.lt.s32.totalorder %s11, 2
      // Predicated region
      $region17: #{tpu_custom_call.1} parent=5 // pred_check
        %p128 = pneg %p127
      $region18: #{tpu_custom_call.1} parent=5 // pred_check_branch
        %130 = sbr.rel (%p128) target = $region20
      $region19: #{tpu_custom_call.1} parent=5 // pred_region
        // Predicated region
        $region21: #{tpu_custom_call.1} parent=19 // pred_check
          %p131 = pneg %p43
        $region22: #{tpu_custom_call.1} parent=19 // pred_check_branch
          %133 = sbr.rel (%p131) target = $region24
        $region23: #{tpu_custom_call.1} parent=19 // pred_region
          %s134 = smul.u32 4, %s19
          %p135 = scmp.lt.s32.totalorder %s134, 7
          %s136 = scalar_select %p135, %s134, 7
          %s137 = smul.addr %s136, 8
          %s138 = scalar_lea.vmem %s0, %s137
          %s139 = smul.u32 4, %s19
        $region24: #{tpu_custom_call.1} parent=19 // pred_fallthru
          _
      $region20: #{tpu_custom_call.1} parent=5 // pred_fallthru
        _
      %p140 = scmp.le.s32.totalorder 1, %s11
      %p141 = scmp.lt.s32.totalorder %s11, 3
      %p142 = pnand %p140, %p141
      %p143 = pneg %p142
      // Predicated region
      $region25: #{tpu_custom_call.1} parent=5 // pred_check
        _
      $region26: #{tpu_custom_call.1} parent=5 // pred_check_branch
        %145 = sbr.rel (%p142) target = $region28
      $region27: #{tpu_custom_call.1} parent=5 // pred_region
        %s146 = ssub.s32 %s11, 1
        %s147 = smul.u32 4, %s21
        %p148 = scmp.lt.s32.totalorder %s147, 7
        %s149 = scalar_select %p148, %s147, 7
        %s150 = smul.addr %s149, 8
        %s151 = scalar_lea.vmem %s0, %s150
        %p152 = pneg %p49
        %p153 = pneg %p46
        %s154 = smul.u32 2, %s20
        %p155 = scmp.lt.s32.totalorder %s154, 1
        %s156 = scalar_select %p155, %s154, 1
        %s157 = smul.addr %s156, 8
        %s158 = scalar_lea.vmem %s1, %s157
        %p159 = pneg %p75
        %p160 = pneg %p72
        %p161 = pneg %p103
        %p162 = pneg %p100
        %s163 = sand.u32 %s90, 1
        %s164 = scalar_lea.sflag [#allocation3], %s163
        %s165 = sand.u32 %s90, 1
        %s166 = smul.addr %s165, 64
        %s167 = scalar_lea.vmem [#allocation2], %s166
        %s168 = smul.u32 4, %s21
        %p169 = scmp.lt.s32.totalorder %s168, 7
        %s170 = scalar_select %p169, %s168, 7
        %s171 = smul.addr %s170, 8
        %s172 = scalar_lea.vmem %s0, %s171
        %s173 = smul.u32 4, %s21
        %s174 = smul.u32 2, %s20
        %p175 = scmp.lt.s32.totalorder %s174, 1
        %s176 = scalar_select %p175, %s174, 1
        %s177 = smul.addr %s176, 8
        %s178 = scalar_lea.vmem %s1, %s177
        %s179 = smul.u32 2, %s20
        %s180 = smul.u32 4, %s21
        %s181 = smul.u32 2, %s20
        %v182 = vld [vmem:[%s172] sm:$0xff]
        %v183 = vld [vmem:[%s172 + $0x8] sm:$0xff]
        %v184 = vld [vmem:[%s172 + $0x10] sm:$0xff]
        %v185 = vld [vmem:[%s172 + $0x18] sm:$0xff]
        %v186 = vld [vmem:[%s178] sm:$0xff]
        %v187 = vld [vmem:[%s178 + $0x8] sm:$0xff]
        %v188 = vld [vmem:[%s178 + $0x10] sm:$0xff]
        %v189 = vld [vmem:[%s178 + $0x18] sm:$0xff]
        %vm190 = vcmask 130048
        %v192 = vsel %vm190, %v182, 0
        %v195 = vsel %vm190, %v183, 0
        %v198 = vsel %vm190, %v184, 0
        %v201 = vsel %vm190, %v185, 0
        %203 = vmatprep.subr.mxu0 0.0
        %204 = vmatpush1.msra.mxu0 0.0
        %205 = vmatprep.subr.mxu0 0.0
        %206 = vmatpush1.msra.mxu0 0.0
        %207 = vmatprep.subr.mxu0 0.0
        %208 = vmatpush1.msra.mxu0 0.0
        %209 = vmatprep.subr.mxu0 0.0
        %210 = vmatpush1.msra.mxu0 0.0
        %211 = vmatprep.subr.mxu0 0.0
        %212 = vmatpush1.msra.mxu0 0.0
        %213 = vmatprep.subr.mxu0 0.0
        %214 = vmatpush1.msra.mxu0 0.0
        %215 = vmatprep.subr.mxu0 0.0
        %216 = vmatpush1.msra.mxu0 0.0
        %217 = vmatprep.subr.mxu0 0.0
        %218 = vmatpush1.msra.mxu0 0.0
        %219 = vmatprep.subr.mxu0 0.0
        %220 = vmatpush1.msra.mxu0 0.0
        %221 = vmatprep.subr.mxu0 0.0
        %222 = vmatpush1.msra.mxu0 0.0
        %223 = vmatprep.subr.mxu0 0.0
        %224 = vmatpush1.msra.mxu0 0.0
        %225 = vmatprep.subr.mxu0 0.0
        %226 = vmatpush1.msra.mxu0 0.0
        %227 = vmatprep.subr.mxu0 0.0
        %228 = vmatpush1.msra.mxu0 0.0
        %229 = vmatprep.subr.mxu0 0.0
        %230 = vmatpush1.msra.mxu0 0.0
        %v231 = vand.u32 %v189, 4294901760
        %232 = vmatprep.subr.mxu0 %v231
        %v233 = vand.u32 %v188, 4294901760
        %234 = vmatpush1.msra.mxu0 %v233
        %v235 = vand.u32 %v187, 4294901760
        %236 = vmatprep.subr.mxu0 %v235
        %v237 = vand.u32 %v186, 4294901760
        %238 = vmatpush1.msra.mxu0 %v237
        %239 = vmatprep.subr.mxu0 0.0
        %240 = vmatpush2.msra.mxu0 0.0
        %241 = vmatprep.subr.mxu0 0.0
        %242 = vmatpush2.msra.mxu0 0.0
        %243 = vmatprep.subr.mxu0 0.0
        %244 = vmatpush2.msra.mxu0 0.0
        %245 = vmatprep.subr.mxu0 0.0
        %246 = vmatpush2.msra.mxu0 0.0
        %247 = vmatprep.subr.mxu0 0.0
        %248 = vmatpush2.msra.mxu0 0.0
        %249 = vmatprep.subr.mxu0 0.0
        %250 = vmatpush2.msra.mxu0 0.0
        %251 = vmatprep.subr.mxu0 0.0
        %252 = vmatpush2.msra.mxu0 0.0
        %253 = vmatprep.subr.mxu0 0.0
        %254 = vmatpush2.msra.mxu0 0.0
        %255 = vmatprep.subr.mxu0 0.0
        %256 = vmatpush2.msra.mxu0 0.0
        %257 = vmatprep.subr.mxu0 0.0
        %258 = vmatpush2.msra.mxu0 0.0
        %259 = vmatprep.subr.mxu0 0.0
        %260 = vmatpush2.msra.mxu0 0.0
        %261 = vmatprep.subr.mxu0 0.0
        %262 = vmatpush2.msra.mxu0 0.0
        %263 = vmatprep.subr.mxu0 0.0
        %264 = vmatpush2.msra.mxu0 0.0
        %265 = vmatprep.subr.mxu0 0.0
        %266 = vmatpush2.msra.mxu0 0.0
        %267 = vmatprep.subr.mxu0 0.0
        %268 = vmatpush2.msra.mxu0 0.0
        %269 = vmatprep.subr.mxu0 0.0
        %270 = vmatpush2.msra.mxu0 0.0
        %271 = vmatprep.mubr.f32.mxu0 0.0
        %v272 = vand.u32 %v192, 4294901760
        %v273 = vsub.f32 %v192, %v272
        %v274 = vand.u32 %v273, 4294901760
        %v275 = vsub.f32 %v273, %v274
        %v276 = vand.u32 %v275, 4294901760
        %277 = vmatmul.mubr.f32.gmra.mxu0 %v276
        %v278 = vpop.f32.mrf.mxu0
        %v279 = vadd.f32 0.0, %v278
        %v280 = vpop.f32.mrf.mxu0
        %v281 = vadd.f32 0.0, %v280
        %282 = vmatprep.mubr.f32.mxu0 0.0
        %v283 = vand.u32 %v195, 4294901760
        %v284 = vsub.f32 %v195, %v283
        %v285 = vand.u32 %v284, 4294901760
        %v286 = vsub.f32 %v284, %v285
        %v287 = vand.u32 %v286, 4294901760
        %288 = vmatmul.mubr.f32.gmra.mxu0 %v287
        %v289 = vpop.f32.mrf.mxu0
        %v290 = vadd.f32 0.0, %v289
        %v291 = vpop.f32.mrf.mxu0
        %v292 = vadd.f32 0.0, %v291
        %293 = vmatprep.mubr.f32.mxu0 0.0
        %v294 = vand.u32 %v198, 4294901760
        %v295 = vsub.f32 %v198, %v294
        %v296 = vand.u32 %v295, 4294901760
        %v297 = vsub.f32 %v295, %v296
        %v298 = vand.u32 %v297, 4294901760
        %299 = vmatmul.mubr.f32.gmra.mxu0 %v298
        %v300 = vpop.f32.mrf.mxu0
        %v301 = vadd.f32 0.0, %v300
        %v302 = vpop.f32.mrf.mxu0
        %v303 = vadd.f32 0.0, %v302
        %304 = vmatprep.mubr.f32.mxu0 0.0
        %v305 = vand.u32 %v201, 4294901760
        %v306 = vsub.f32 %v201, %v305
        %v307 = vand.u32 %v306, 4294901760
        %v308 = vsub.f32 %v306, %v307
        %v309 = vand.u32 %v308, 4294901760
        %310 = vmatmul.mubr.f32.gmra.mxu0 %v309
        %v311 = vpop.f32.mrf.mxu0
        %v312 = vadd.f32 0.0, %v311
        %v313 = vpop.f32.mrf.mxu0
        %v314 = vadd.f32 0.0, %v313
        %315 = vdwg.mxu0
        %316 = vmatprep.subr.mxu0 0.0
        %317 = vmatpush1.msra.mxu0 0.0
        %318 = vmatprep.subr.mxu0 0.0
        %319 = vmatpush1.msra.mxu0 0.0
        %320 = vmatprep.subr.mxu0 0.0
        %321 = vmatpush1.msra.mxu0 0.0
        %322 = vmatprep.subr.mxu0 0.0
        %323 = vmatpush1.msra.mxu0 0.0
        %324 = vmatprep.subr.mxu0 0.0
        %325 = vmatpush1.msra.mxu0 0.0
        %326 = vmatprep.subr.mxu0 0.0
        %327 = vmatpush1.msra.mxu0 0.0
        %328 = vmatprep.subr.mxu0 0.0
        %329 = vmatpush1.msra.mxu0 0.0
        %330 = vmatprep.subr.mxu0 0.0
        %331 = vmatpush1.msra.mxu0 0.0
        %332 = vmatprep.subr.mxu0 0.0
        %333 = vmatpush1.msra.mxu0 0.0
        %334 = vmatprep.subr.mxu0 0.0
        %335 = vmatpush1.msra.mxu0 0.0
        %336 = vmatprep.subr.mxu0 0.0
        %337 = vmatpush1.msra.mxu0 0.0
        %338 = vmatprep.subr.mxu0 0.0
        %339 = vmatpush1.msra.mxu0 0.0
        %340 = vmatprep.subr.mxu0 0.0
        %341 = vmatpush1.msra.mxu0 0.0
        %342 = vmatprep.subr.mxu0 0.0
        %343 = vmatpush1.msra.mxu0 0.0
        %v344 = vand.u32 %v189, 4294901760
        %v345 = vsub.f32 %v189, %v344
        %v346 = vand.u32 %v345, 4294901760
        %v347 = vsub.f32 %v345, %v346
        %v348 = vand.u32 %v347, 4294901760
        %349 = vmatprep.subr.mxu0 %v348
        %v350 = vand.u32 %v188, 4294901760
        %v351 = vsub.f32 %v188, %v350
        %v352 = vand.u32 %v351, 4294901760
        %v353 = vsub.f32 %v351, %v352
        %v354 = vand.u32 %v353, 4294901760
        %355 = vmatpush1.msra.mxu0 %v354
        %v356 = vand.u32 %v187, 4294901760
        %v357 = vsub.f32 %v187, %v356
        %v358 = vand.u32 %v357, 4294901760
        %v359 = vsub.f32 %v357, %v358
        %v360 = vand.u32 %v359, 4294901760
        %361 = vmatprep.subr.mxu0 %v360
        %v362 = vand.u32 %v186, 4294901760
        %v363 = vsub.f32 %v186, %v362
        %v364 = vand.u32 %v363, 4294901760
        %v365 = vsub.f32 %v363, %v364
        %v366 = vand.u32 %v365, 4294901760
        %367 = vmatpush1.msra.mxu0 %v366
        %368 = vmatprep.subr.mxu0 0.0
        %369 = vmatpush2.msra.mxu0 0.0
        %370 = vmatprep.subr.mxu0 0.0
        %371 = vmatpush2.msra.mxu0 0.0
        %372 = vmatprep.subr.mxu0 0.0
        %373 = vmatpush2.msra.mxu0 0.0
        %374 = vmatprep.subr.mxu0 0.0
        %375 = vmatpush2.msra.mxu0 0.0
        %376 = vmatprep.subr.mxu0 0.0
        %377 = vmatpush2.msra.mxu0 0.0
        %378 = vmatprep.subr.mxu0 0.0
        %379 = vmatpush2.msra.mxu0 0.0
        %380 = vmatprep.subr.mxu0 0.0
        %381 = vmatpush2.msra.mxu0 0.0
        %382 = vmatprep.subr.mxu0 0.0
        %383 = vmatpush2.msra.mxu0 0.0
        %384 = vmatprep.subr.mxu0 0.0
        %385 = vmatpush2.msra.mxu0 0.0
        %386 = vmatprep.subr.mxu0 0.0
        %387 = vmatpush2.msra.mxu0 0.0
        %388 = vmatprep.subr.mxu0 0.0
        %389 = vmatpush2.msra.mxu0 0.0
        %390 = vmatprep.subr.mxu0 0.0
        %391 = vmatpush2.msra.mxu0 0.0
        %392 = vmatprep.subr.mxu0 0.0
        %393 = vmatpush2.msra.mxu0 0.0
        %394 = vmatprep.subr.mxu0 0.0
        %395 = vmatpush2.msra.mxu0 0.0
        %396 = vmatprep.subr.mxu0 0.0
        %397 = vmatpush2.msra.mxu0 0.0
        %398 = vmatprep.subr.mxu0 0.0
        %399 = vmatpush2.msra.mxu0 0.0
        %400 = vmatprep.mubr.f32.mxu0 0.0
        %v401 = vand.u32 %v192, 4294901760
        %402 = vmatmul.mubr.f32.gmra.mxu0 %v401
        %v403 = vpop.f32.mrf.mxu0
        %v404 = vadd.f32 %v279, %v403
        %v405 = vpop.f32.mrf.mxu0
        %v406 = vadd.f32 %v281, %v405
        %407 = vmatprep.mubr.f32.mxu0 0.0
        %v408 = vand.u32 %v195, 4294901760
        %409 = vmatmul.mubr.f32.gmra.mxu0 %v408
        %v410 = vpop.f32.mrf.mxu0
        %v411 = vadd.f32 %v290, %v410
        %v412 = vpop.f32.mrf.mxu0
        %v413 = vadd.f32 %v292, %v412
        %414 = vmatprep.mubr.f32.mxu0 0.0
        %v415 = vand.u32 %v198, 4294901760
        %416 = vmatmul.mubr.f32.gmra.mxu0 %v415
        %v417 = vpop.f32.mrf.mxu0
        %v418 = vadd.f32 %v301, %v417
        %v419 = vpop.f32.mrf.mxu0
        %v420 = vadd.f32 %v303, %v419
        %421 = vmatprep.mubr.f32.mxu0 0.0
        %v422 = vand.u32 %v201, 4294901760
        %423 = vmatmul.mubr.f32.gmra.mxu0 %v422
        %v424 = vpop.f32.mrf.mxu0
        %v425 = vadd.f32 %v312, %v424
        %v426 = vpop.f32.mrf.mxu0
        %v427 = vadd.f32 %v314, %v426
        %428 = vdwg.mxu0
        %429 = vmatprep.subr.mxu0 0.0
        %430 = vmatpush1.msra.mxu0 0.0
        %431 = vmatprep.subr.mxu0 0.0
        %432 = vmatpush1.msra.mxu0 0.0
        %433 = vmatprep.subr.mxu0 0.0
        %434 = vmatpush1.msra.mxu0 0.0
        %435 = vmatprep.subr.mxu0 0.0
        %436 = vmatpush1.msra.mxu0 0.0
        %437 = vmatprep.subr.mxu0 0.0
        %438 = vmatpush1.msra.mxu0 0.0
        %439 = vmatprep.subr.mxu0 0.0
        %440 = vmatpush1.msra.mxu0 0.0
        %441 = vmatprep.subr.mxu0 0.0
        %442 = vmatpush1.msra.mxu0 0.0
        %443 = vmatprep.subr.mxu0 0.0
        %444 = vmatpush1.msra.mxu0 0.0
        %445 = vmatprep.subr.mxu0 0.0
        %446 = vmatpush1.msra.mxu0 0.0
        %447 = vmatprep.subr.mxu0 0.0
        %448 = vmatpush1.msra.mxu0 0.0
        %449 = vmatprep.subr.mxu0 0.0
        %450 = vmatpush1.msra.mxu0 0.0
        %451 = vmatprep.subr.mxu0 0.0
        %452 = vmatpush1.msra.mxu0 0.0
        %453 = vmatprep.subr.mxu0 0.0
        %454 = vmatpush1.msra.mxu0 0.0
        %455 = vmatprep.subr.mxu0 0.0
        %456 = vmatpush1.msra.mxu0 0.0
        %v457 = vand.u32 %v189, 4294901760
        %v458 = vsub.f32 %v189, %v457
        %459 = vmatprep.subr.mxu0 %v458
        %v460 = vand.u32 %v188, 4294901760
        %v461 = vsub.f32 %v188, %v460
        %462 = vmatpush1.msra.mxu0 %v461
        %v463 = vand.u32 %v187, 4294901760
        %v464 = vsub.f32 %v187, %v463
        %465 = vmatprep.subr.mxu0 %v464
        %v466 = vand.u32 %v186, 4294901760
        %v467 = vsub.f32 %v186, %v466
        %468 = vmatpush1.msra.mxu0 %v467
        %469 = vmatprep.subr.mxu0 0.0
        %470 = vmatpush2.msra.mxu0 0.0
        %471 = vmatprep.subr.mxu0 0.0
        %472 = vmatpush2.msra.mxu0 0.0
        %473 = vmatprep.subr.mxu0 0.0
        %474 = vmatpush2.msra.mxu0 0.0
        %475 = vmatprep.subr.mxu0 0.0
        %476 = vmatpush2.msra.mxu0 0.0
        %477 = vmatprep.subr.mxu0 0.0
        %478 = vmatpush2.msra.mxu0 0.0
        %479 = vmatprep.subr.mxu0 0.0
        %480 = vmatpush2.msra.mxu0 0.0
        %481 = vmatprep.subr.mxu0 0.0
        %482 = vmatpush2.msra.mxu0 0.0
        %483 = vmatprep.subr.mxu0 0.0
        %484 = vmatpush2.msra.mxu0 0.0
        %485 = vmatprep.subr.mxu0 0.0
        %486 = vmatpush2.msra.mxu0 0.0
        %487 = vmatprep.subr.mxu0 0.0
        %488 = vmatpush2.msra.mxu0 0.0
        %489 = vmatprep.subr.mxu0 0.0
        %490 = vmatpush2.msra.mxu0 0.0
        %491 = vmatprep.subr.mxu0 0.0
        %492 = vmatpush2.msra.mxu0 0.0
        %493 = vmatprep.subr.mxu0 0.0
        %494 = vmatpush2.msra.mxu0 0.0
        %495 = vmatprep.subr.mxu0 0.0
        %496 = vmatpush2.msra.mxu0 0.0
        %497 = vmatprep.subr.mxu0 0.0
        %498 = vmatpush2.msra.mxu0 0.0
        %499 = vmatprep.subr.mxu0 0.0
        %500 = vmatpush2.msra.mxu0 0.0
        %501 = vmatprep.mubr.f32.mxu0 0.0
        %v502 = vand.u32 %v192, 4294901760
        %v503 = vsub.f32 %v192, %v502
        %504 = vmatmul.mubr.f32.gmra.mxu0 %v503
        %v505 = vpop.f32.mrf.mxu0
        %v506 = vadd.f32 %v404, %v505
        %v507 = vpop.f32.mrf.mxu0
        %v508 = vadd.f32 %v406, %v507
        %509 = vmatprep.mubr.f32.mxu0 0.0
        %v510 = vand.u32 %v195, 4294901760
        %v511 = vsub.f32 %v195, %v510
        %512 = vmatmul.mubr.f32.gmra.mxu0 %v511
        %v513 = vpop.f32.mrf.mxu0
        %v514 = vadd.f32 %v411, %v513
        %v515 = vpop.f32.mrf.mxu0
        %v516 = vadd.f32 %v413, %v515
        %517 = vmatprep.mubr.f32.mxu0 0.0
        %v518 = vand.u32 %v198, 4294901760
        %v519 = vsub.f32 %v198, %v518
        %520 = vmatmul.mubr.f32.gmra.mxu0 %v519
        %v521 = vpop.f32.mrf.mxu0
        %v522 = vadd.f32 %v418, %v521
        %v523 = vpop.f32.mrf.mxu0
        %v524 = vadd.f32 %v420, %v523
        %525 = vmatprep.mubr.f32.mxu0 0.0
        %v526 = vand.u32 %v201, 4294901760
        %v527 = vsub.f32 %v201, %v526
        %528 = vmatmul.mubr.f32.gmra.mxu0 %v527
        %v529 = vpop.f32.mrf.mxu0
        %v530 = vadd.f32 %v425, %v529
        %v531 = vpop.f32.mrf.mxu0
        %v532 = vadd.f32 %v427, %v531
        %533 = vdwg.mxu0
        %534 = vmatprep.subr.mxu0 0.0
        %535 = vmatpush1.msra.mxu0 0.0
        %536 = vmatprep.subr.mxu0 0.0
        %537 = vmatpush1.msra.mxu0 0.0
        %538 = vmatprep.subr.mxu0 0.0
        %539 = vmatpush1.msra.mxu0 0.0
        %540 = vmatprep.subr.mxu0 0.0
        %541 = vmatpush1.msra.mxu0 0.0
        %542 = vmatprep.subr.mxu0 0.0
        %543 = vmatpush1.msra.mxu0 0.0
        %544 = vmatprep.subr.mxu0 0.0
        %545 = vmatpush1.msra.mxu0 0.0
        %546 = vmatprep.subr.mxu0 0.0
        %547 = vmatpush1.msra.mxu0 0.0
        %548 = vmatprep.subr.mxu0 0.0
        %549 = vmatpush1.msra.mxu0 0.0
        %550 = vmatprep.subr.mxu0 0.0
        %551 = vmatpush1.msra.mxu0 0.0
        %552 = vmatprep.subr.mxu0 0.0
        %553 = vmatpush1.msra.mxu0 0.0
        %554 = vmatprep.subr.mxu0 0.0
        %555 = vmatpush1.msra.mxu0 0.0
        %556 = vmatprep.subr.mxu0 0.0
        %557 = vmatpush1.msra.mxu0 0.0
        %558 = vmatprep.subr.mxu0 0.0
        %559 = vmatpush1.msra.mxu0 0.0
        %560 = vmatprep.subr.mxu0 0.0
        %561 = vmatpush1.msra.mxu0 0.0
        %v562 = vand.u32 %v189, 4294901760
        %563 = vmatprep.subr.mxu0 %v562
        %v564 = vand.u32 %v188, 4294901760
        %565 = vmatpush1.msra.mxu0 %v564
        %v566 = vand.u32 %v187, 4294901760
        %567 = vmatprep.subr.mxu0 %v566
        %v568 = vand.u32 %v186, 4294901760
        %569 = vmatpush1.msra.mxu0 %v568
        %570 = vmatprep.subr.mxu0 0.0
        %571 = vmatpush2.msra.mxu0 0.0
        %572 = vmatprep.subr.mxu0 0.0
        %573 = vmatpush2.msra.mxu0 0.0
        %574 = vmatprep.subr.mxu0 0.0
        %575 = vmatpush2.msra.mxu0 0.0
        %576 = vmatprep.subr.mxu0 0.0
        %577 = vmatpush2.msra.mxu0 0.0
        %578 = vmatprep.subr.mxu0 0.0
        %579 = vmatpush2.msra.mxu0 0.0
        %580 = vmatprep.subr.mxu0 0.0
        %581 = vmatpush2.msra.mxu0 0.0
        %582 = vmatprep.subr.mxu0 0.0
        %583 = vmatpush2.msra.mxu0 0.0
        %584 = vmatprep.subr.mxu0 0.0
        %585 = vmatpush2.msra.mxu0 0.0
        %586 = vmatprep.subr.mxu0 0.0
        %587 = vmatpush2.msra.mxu0 0.0
        %588 = vmatprep.subr.mxu0 0.0
        %589 = vmatpush2.msra.mxu0 0.0
        %590 = vmatprep.subr.mxu0 0.0
        %591 = vmatpush2.msra.mxu0 0.0
        %592 = vmatprep.subr.mxu0 0.0
        %593 = vmatpush2.msra.mxu0 0.0
        %594 = vmatprep.subr.mxu0 0.0
        %595 = vmatpush2.msra.mxu0 0.0
        %596 = vmatprep.subr.mxu0 0.0
        %597 = vmatpush2.msra.mxu0 0.0
        %598 = vmatprep.subr.mxu0 0.0
        %599 = vmatpush2.msra.mxu0 0.0
        %600 = vmatprep.subr.mxu0 0.0
        %601 = vmatpush2.msra.mxu0 0.0
        %602 = vmatprep.mubr.f32.mxu0 0.0
        %v603 = vand.u32 %v192, 4294901760
        %v604 = vsub.f32 %v192, %v603
        %v605 = vand.u32 %v604, 4294901760
        %606 = vmatmul.mubr.f32.gmra.mxu0 %v605
        %v607 = vpop.f32.mrf.mxu0
        %v608 = vadd.f32 %v506, %v607
        %v609 = vpop.f32.mrf.mxu0
        %v610 = vadd.f32 %v508, %v609
        %611 = vmatprep.mubr.f32.mxu0 0.0
        %v612 = vand.u32 %v195, 4294901760
        %v613 = vsub.f32 %v195, %v612
        %v614 = vand.u32 %v613, 4294901760
        %615 = vmatmul.mubr.f32.gmra.mxu0 %v614
        %v616 = vpop.f32.mrf.mxu0
        %v617 = vadd.f32 %v514, %v616
        %v618 = vpop.f32.mrf.mxu0
        %v619 = vadd.f32 %v516, %v618
        %620 = vmatprep.mubr.f32.mxu0 0.0
        %v621 = vand.u32 %v198, 4294901760
        %v622 = vsub.f32 %v198, %v621
        %v623 = vand.u32 %v622, 4294901760
        %624 = vmatmul.mubr.f32.gmra.mxu0 %v623
        %v625 = vpop.f32.mrf.mxu0
        %v626 = vadd.f32 %v522, %v625
        %v627 = vpop.f32.mrf.mxu0
        %v628 = vadd.f32 %v524, %v627
        %629 = vmatprep.mubr.f32.mxu0 0.0
        %v630 = vand.u32 %v201, 4294901760
        %v631 = vsub.f32 %v201, %v630
        %v632 = vand.u32 %v631, 4294901760
        %633 = vmatmul.mubr.f32.gmra.mxu0 %v632
        %v634 = vpop.f32.mrf.mxu0
        %v635 = vadd.f32 %v530, %v634
        %v636 = vpop.f32.mrf.mxu0
        %v637 = vadd.f32 %v532, %v636
        %638 = vdwg.mxu0
        %639 = vmatprep.subr.mxu0 0.0
        %640 = vmatpush1.msra.mxu0 0.0
        %641 = vmatprep.subr.mxu0 0.0
        %642 = vmatpush1.msra.mxu0 0.0
        %643 = vmatprep.subr.mxu0 0.0
        %644 = vmatpush1.msra.mxu0 0.0
        %645 = vmatprep.subr.mxu0 0.0
        %646 = vmatpush1.msra.mxu0 0.0
        %647 = vmatprep.subr.mxu0 0.0
        %648 = vmatpush1.msra.mxu0 0.0
        %649 = vmatprep.subr.mxu0 0.0
        %650 = vmatpush1.msra.mxu0 0.0
        %651 = vmatprep.subr.mxu0 0.0
        %652 = vmatpush1.msra.mxu0 0.0
        %653 = vmatprep.subr.mxu0 0.0
        %654 = vmatpush1.msra.mxu0 0.0
        %655 = vmatprep.subr.mxu0 0.0
        %656 = vmatpush1.msra.mxu0 0.0
        %657 = vmatprep.subr.mxu0 0.0
        %658 = vmatpush1.msra.mxu0 0.0
        %659 = vmatprep.subr.mxu0 0.0
        %660 = vmatpush1.msra.mxu0 0.0
        %661 = vmatprep.subr.mxu0 0.0
        %662 = vmatpush1.msra.mxu0 0.0
        %663 = vmatprep.subr.mxu0 0.0
        %664 = vmatpush1.msra.mxu0 0.0
        %665 = vmatprep.subr.mxu0 0.0
        %666 = vmatpush1.msra.mxu0 0.0
        %v667 = vand.u32 %v189, 4294901760
        %v668 = vsub.f32 %v189, %v667
        %v669 = vand.u32 %v668, 4294901760
        %670 = vmatprep.subr.mxu0 %v669
        %v671 = vand.u32 %v188, 4294901760
        %v672 = vsub.f32 %v188, %v671
        %v673 = vand.u32 %v672, 4294901760
        %674 = vmatpush1.msra.mxu0 %v673
        %v675 = vand.u32 %v187, 4294901760
        %v676 = vsub.f32 %v187, %v675
        %v677 = vand.u32 %v676, 4294901760
        %678 = vmatprep.subr.mxu0 %v677
        %v679 = vand.u32 %v186, 4294901760
        %v680 = vsub.f32 %v186, %v679
        %v681 = vand.u32 %v680, 4294901760
        %682 = vmatpush1.msra.mxu0 %v681
        %683 = vmatprep.subr.mxu0 0.0
        %684 = vmatpush2.msra.mxu0 0.0
        %685 = vmatprep.subr.mxu0 0.0
        %686 = vmatpush2.msra.mxu0 0.0
        %687 = vmatprep.subr.mxu0 0.0
        %688 = vmatpush2.msra.mxu0 0.0
        %689 = vmatprep.subr.mxu0 0.0
        %690 = vmatpush2.msra.mxu0 0.0
        %691 = vmatprep.subr.mxu0 0.0
        %692 = vmatpush2.msra.mxu0 0.0
        %693 = vmatprep.subr.mxu0 0.0
        %694 = vmatpush2.msra.mxu0 0.0
        %695 = vmatprep.subr.mxu0 0.0
        %696 = vmatpush2.msra.mxu0 0.0
        %697 = vmatprep.subr.mxu0 0.0
        %698 = vmatpush2.msra.mxu0 0.0
        %699 = vmatprep.subr.mxu0 0.0
        %700 = vmatpush2.msra.mxu0 0.0
        %701 = vmatprep.subr.mxu0 0.0
        %702 = vmatpush2.msra.mxu0 0.0
        %703 = vmatprep.subr.mxu0 0.0
        %704 = vmatpush2.msra.mxu0 0.0
        %705 = vmatprep.subr.mxu0 0.0
        %706 = vmatpush2.msra.mxu0 0.0
        %707 = vmatprep.subr.mxu0 0.0
        %708 = vmatpush2.msra.mxu0 0.0
        %709 = vmatprep.subr.mxu0 0.0
        %710 = vmatpush2.msra.mxu0 0.0
        %711 = vmatprep.subr.mxu0 0.0
        %712 = vmatpush2.msra.mxu0 0.0
        %713 = vmatprep.subr.mxu0 0.0
        %714 = vmatpush2.msra.mxu0 0.0
        %715 = vmatprep.mubr.f32.mxu0 0.0
        %v716 = vand.u32 %v192, 4294901760
        %717 = vmatmul.mubr.f32.gmra.mxu0 %v716
        %v718 = vpop.f32.mrf.mxu0
        %v719 = vadd.f32 %v608, %v718
        %v720 = vpop.f32.mrf.mxu0
        %v721 = vadd.f32 %v610, %v720
        %722 = vmatprep.mubr.f32.mxu0 0.0
        %v723 = vand.u32 %v195, 4294901760
        %724 = vmatmul.mubr.f32.gmra.mxu0 %v723
        %v725 = vpop.f32.mrf.mxu0
        %v726 = vadd.f32 %v617, %v725
        %v727 = vpop.f32.mrf.mxu0
        %v728 = vadd.f32 %v619, %v727
        %729 = vmatprep.mubr.f32.mxu0 0.0
        %v730 = vand.u32 %v198, 4294901760
        %731 = vmatmul.mubr.f32.gmra.mxu0 %v730
        %v732 = vpop.f32.mrf.mxu0
        %v733 = vadd.f32 %v626, %v732
        %v734 = vpop.f32.mrf.mxu0
        %v735 = vadd.f32 %v628, %v734
        %736 = vmatprep.mubr.f32.mxu0 0.0
        %v737 = vand.u32 %v201, 4294901760
        %738 = vmatmul.mubr.f32.gmra.mxu0 %v737
        %v739 = vpop.f32.mrf.mxu0
        %v740 = vadd.f32 %v635, %v739
        %v741 = vpop.f32.mrf.mxu0
        %v742 = vadd.f32 %v637, %v741
        %743 = vdwg.mxu0
        %744 = vmatprep.subr.mxu0 0.0
        %745 = vmatpush1.msra.mxu0 0.0
        %746 = vmatprep.subr.mxu0 0.0
        %747 = vmatpush1.msra.mxu0 0.0
        %748 = vmatprep.subr.mxu0 0.0
        %749 = vmatpush1.msra.mxu0 0.0
        %750 = vmatprep.subr.mxu0 0.0
        %751 = vmatpush1.msra.mxu0 0.0
        %752 = vmatprep.subr.mxu0 0.0
        %753 = vmatpush1.msra.mxu0 0.0
        %754 = vmatprep.subr.mxu0 0.0
        %755 = vmatpush1.msra.mxu0 0.0
        %756 = vmatprep.subr.mxu0 0.0
        %757 = vmatpush1.msra.mxu0 0.0
        %758 = vmatprep.subr.mxu0 0.0
        %759 = vmatpush1.msra.mxu0 0.0
        %760 = vmatprep.subr.mxu0 0.0
        %761 = vmatpush1.msra.mxu0 0.0
        %762 = vmatprep.subr.mxu0 0.0
        %763 = vmatpush1.msra.mxu0 0.0
        %764 = vmatprep.subr.mxu0 0.0
        %765 = vmatpush1.msra.mxu0 0.0
        %766 = vmatprep.subr.mxu0 0.0
        %767 = vmatpush1.msra.mxu0 0.0
        %768 = vmatprep.subr.mxu0 0.0
        %769 = vmatpush1.msra.mxu0 0.0
        %770 = vmatprep.subr.mxu0 0.0
        %771 = vmatpush1.msra.mxu0 0.0
        %v772 = vand.u32 %v189, 4294901760
        %773 = vmatprep.subr.mxu0 %v772
        %v774 = vand.u32 %v188, 4294901760
        %775 = vmatpush1.msra.mxu0 %v774
        %v776 = vand.u32 %v187, 4294901760
        %777 = vmatprep.subr.mxu0 %v776
        %v778 = vand.u32 %v186, 4294901760
        %779 = vmatpush1.msra.mxu0 %v778
        %780 = vmatprep.subr.mxu0 0.0
        %781 = vmatpush2.msra.mxu0 0.0
        %782 = vmatprep.subr.mxu0 0.0
        %783 = vmatpush2.msra.mxu0 0.0
        %784 = vmatprep.subr.mxu0 0.0
        %785 = vmatpush2.msra.mxu0 0.0
        %786 = vmatprep.subr.mxu0 0.0
        %787 = vmatpush2.msra.mxu0 0.0
        %788 = vmatprep.subr.mxu0 0.0
        %789 = vmatpush2.msra.mxu0 0.0
        %790 = vmatprep.subr.mxu0 0.0
        %791 = vmatpush2.msra.mxu0 0.0
        %792 = vmatprep.subr.mxu0 0.0
        %793 = vmatpush2.msra.mxu0 0.0
        %794 = vmatprep.subr.mxu0 0.0
        %795 = vmatpush2.msra.mxu0 0.0
        %796 = vmatprep.subr.mxu0 0.0
        %797 = vmatpush2.msra.mxu0 0.0
        %798 = vmatprep.subr.mxu0 0.0
        %799 = vmatpush2.msra.mxu0 0.0
        %800 = vmatprep.subr.mxu0 0.0
        %801 = vmatpush2.msra.mxu0 0.0
        %802 = vmatprep.subr.mxu0 0.0
        %803 = vmatpush2.msra.mxu0 0.0
        %804 = vmatprep.subr.mxu0 0.0
        %805 = vmatpush2.msra.mxu0 0.0
        %806 = vmatprep.subr.mxu0 0.0
        %807 = vmatpush2.msra.mxu0 0.0
        %808 = vmatprep.subr.mxu0 0.0
        %809 = vmatpush2.msra.mxu0 0.0
        %810 = vmatprep.subr.mxu0 0.0
        %811 = vmatpush2.msra.mxu0 0.0
        %812 = vmatprep.mubr.f32.mxu0 0.0
        %v813 = vand.u32 %v192, 4294901760
        %814 = vmatmul.mubr.f32.gmra.mxu0 %v813
        %v815 = vpop.f32.mrf.mxu0
        %v816 = vadd.f32 %v719, %v815
        %v817 = vpop.f32.mrf.mxu0
        %v818 = vadd.f32 %v721, %v817
        %819 = vmatprep.mubr.f32.mxu0 0.0
        %v820 = vand.u32 %v195, 4294901760
        %821 = vmatmul.mubr.f32.gmra.mxu0 %v820
        %v822 = vpop.f32.mrf.mxu0
        %v823 = vadd.f32 %v726, %v822
        %v824 = vpop.f32.mrf.mxu0
        %v825 = vadd.f32 %v728, %v824
        %826 = vmatprep.mubr.f32.mxu0 0.0
        %v827 = vand.u32 %v198, 4294901760
        %828 = vmatmul.mubr.f32.gmra.mxu0 %v827
        %v829 = vpop.f32.mrf.mxu0
        %v830 = vadd.f32 %v733, %v829
        %v831 = vpop.f32.mrf.mxu0
        %v832 = vadd.f32 %v735, %v831
        %833 = vmatprep.mubr.f32.mxu0 0.0
        %v834 = vand.u32 %v201, 4294901760
        %835 = vmatmul.mubr.f32.gmra.mxu0 %v834
        %v836 = vpop.f32.mrf.mxu0
        %v837 = vadd.f32 %v740, %v836
        %v838 = vpop.f32.mrf.mxu0
        %v839 = vadd.f32 %v742, %v838
        %840 = vdwg.mxu0
        %841 = vst [vmem:[%s167] sm:$0xff] %v816
        %842 = vst [vmem:[%s167 + $0x8] sm:$0xff] %v818
        %843 = vst [vmem:[%s167 + $0x10] sm:$0xff] %v823
        %844 = vst [vmem:[%s167 + $0x18] sm:$0xff] %v825
        %845 = vst [vmem:[%s167 + $0x20] sm:$0xff] %v830
        %846 = vst [vmem:[%s167 + $0x28] sm:$0xff] %v832
        %847 = vst [vmem:[%s167 + $0x30] sm:$0xff] %v837
        %848 = vst [vmem:[%s167 + $0x38] sm:$0xff] %v839
        %s849 = sand.u32 %s90, 1
        %s850 = scalar_lea.sflag [#allocation3], %s849
        %s851 = sand.u32 %s90, 1
        %s852 = smul.addr %s851, 64
        %s853 = scalar_lea.vmem [#allocation2], %s852
        // Predicated region
        $region29: #{tpu_custom_call.1} parent=27 // pred_check
          %p854 = pneg %p100
        $region30: #{tpu_custom_call.1} parent=27 // pred_check_branch
          %856 = sbr.rel (%p854) target = $region32
        $region31: #{tpu_custom_call.1} parent=27 // pred_region
          %s857 = smul.u32 4, %s21
          %s858 = smul.u32 2, %s20
          %s860 = ssub.s32 1024, 1024
          %861 = vsyncadd %s850, %s860
          %s862 = smul.addr %s857, 2
          %s863 = sadd.s32 %s858, %s862
          %s864 = smul.addr %s863, 128
          %s865 = scalar_lea.hbm %s2, %s864
          %s866 = sshll.u32 %s853, 4
          %s867 = int_to_ptr.vmem [resolvable:$true] %s866
          %872 = dma.vmem_to_hbm [thread:$0]  %s867, 1024, %s865, %s850, 256, 256, 16
        $region32: #{tpu_custom_call.1} parent=27 // pred_fallthru
          _
      $region28: #{tpu_custom_call.1} parent=5 // pred_fallthru
        _
      %p873 = scmp.le.s32.totalorder 2, %s11
      // Predicated region
      $region33: #{tpu_custom_call.1} parent=5 // pred_check
        %p874 = pneg %p873
      $region34: #{tpu_custom_call.1} parent=5 // pred_check_branch
        %876 = sbr.rel (%p874) target = $region36
      $region35: #{tpu_custom_call.1} parent=5 // pred_region
        %s877 = ssub.s32 %s11, 2
        // Predicated region
        $region37: #{tpu_custom_call.1} parent=35 // pred_check
          %p878 = pneg %p106
        $region38: #{tpu_custom_call.1} parent=35 // pred_check_branch
          %880 = sbr.rel (%p878) target = $region40
        $region39: #{tpu_custom_call.1} parent=35 // pred_region
          %s881 = sand.u32 %s91, 1
          %s882 = scalar_lea.sflag [#allocation3], %s881
          %s883 = sand.u32 %s91, 1
          %s884 = smul.addr %s883, 64
          %s885 = scalar_lea.vmem [#allocation2], %s884
          %886 = dma.done %s882, 1024
        $region40: #{tpu_custom_call.1} parent=35 // pred_fallthru
          _
      $region36: #{tpu_custom_call.1} parent=5 // pred_fallthru
        _
    $region6: #{tpu_custom_call.1} parent=1 // loop_footer
      %s15 = sadd.s32 1, %s11
    $region7: #{tpu_custom_call.1} parent=1 // loop_footer_branch
      %10 = sbr.rel target = $region3
    $region8: #{tpu_custom_call.1} parent=1 // loop_exit
      _
    %887 = vsyncpa [#allocation3], 1
    %s888 = scalar_lea.sflag [#allocation3], 1
    %889 = vsyncpa %s888, 1

</llo_original>
